<compile_context>
chip_gen: v7x
topology: tpu7x:2x2x1
jax: 0.10.0
libtpu: 0.0.40
codegen_flags: <defaults>
</compile_context>

<pallas_src>
import functools

import jax
import jax.numpy as jnp
from jax.experimental import pallas as pl
from jax.experimental.pallas import tpu as pltpu


def _round_up(n, m):
    return ((n + m - 1) // m) * m


def actor_critic_kernel(x_ref, w1_ref, w2_ref, wh_ref, b_ref, out_ref):
    # x_ref:  (TB, S)           bf16  (state dim unpadded -> no 8x read blowup)
    # w1_ref: (S, H_pad)        bf16
    # w2_ref: (H_pad, H_pad)    bf16
    # wh_ref: (H_pad, HEAD_pad) bf16  (policy || value heads, zero-padded)
    # b_ref:  (8, LANE)         f32   (rows 0..2: b1, b2, b_head; rest zero)
    # out_ref:(TB, HEAD_pad)    bf16  (lane-dense, unmasked stores)
    h_dim = w1_ref.shape[1]
    head_dim = wh_ref.shape[1]

    x = x_ref[...]

    # Shared trunk: Linear -> ReLU -> Linear -> ReLU.
    # bf16 operands on the MXU, f32 accumulate; bias/ReLU kept in f32 so the
    # same kernel is valid on v5e (no bf16 VALU) as well as v6e/v7x.
    h1 = jnp.dot(x, w1_ref[...], preferred_element_type=jnp.float32)
    h1 = jnp.maximum(h1 + b_ref[0:1, :h_dim], 0.0)

    h2 = jnp.dot(h1.astype(jnp.bfloat16), w2_ref[...],
                 preferred_element_type=jnp.float32)
    h2 = jnp.maximum(h2 + b_ref[1:2, :h_dim], 0.0)

    # Fused policy + value head: one lane-dense matmul; bf16 store halves the
    # dominant HBM output stream.
    out = (jnp.dot(h2.astype(jnp.bfloat16), wh_ref[...],
                   preferred_element_type=jnp.float32)
           + b_ref[2:3, :head_dim])
    out_ref[...] = out.astype(out_ref.dtype)


def init_params(key, state_dim, action_dim, hidden_dim):
    """PyTorch nn.Linear-style init (uniform +/- 1/sqrt(fan_in)).
    Weights stored as (in, out); biases as (1, out)."""
    keys = jax.random.split(key, 8)

    def lin(kw, kb, fan_in, fan_out):
        bound = 1.0 / jnp.sqrt(fan_in)
        w = jax.random.uniform(kw, (fan_in, fan_out), jnp.float32, -bound, bound)
        b = jax.random.uniform(kb, (1, fan_out), jnp.float32, -bound, bound)
        return w, b

    w1, b1 = lin(keys[0], keys[1], state_dim, hidden_dim)
    w2, b2 = lin(keys[2], keys[3], hidden_dim, hidden_dim)
    wp, bp = lin(keys[4], keys[5], hidden_dim, action_dim)
    wv, bv = lin(keys[6], keys[7], hidden_dim, 1)
    return {"w1": w1, "b1": b1, "w2": w2, "b2": b2,
            "wp": wp, "bp": bp, "wv": wv, "bv": bv}


def pack_params(p, state_dim, action_dim, hidden_dim):
    """One-time host-side packing: pad lane dims to 128, fuse policy+value
    heads, pack biases into a full (8,128) tile, cast matmul operands to bf16.
    The state (K) dim of w1 is left UNPADDED so x needs no feature padding."""
    h_pad = _round_up(hidden_dim, 128)
    head = action_dim + 1
    head_pad = _round_up(head, 128)
    lane = max(h_pad, head_pad)

    w1 = jnp.zeros((state_dim, h_pad), jnp.float32)
    w1 = w1.at[:, :hidden_dim].set(p["w1"])
    w2 = jnp.zeros((h_pad, h_pad), jnp.float32)
    w2 = w2.at[:hidden_dim, :hidden_dim].set(p["w2"])
    wh = jnp.zeros((h_pad, head_pad), jnp.float32)
    wh = wh.at[:hidden_dim, :action_dim].set(p["wp"])
    wh = wh.at[:hidden_dim, action_dim:head].set(p["wv"])

    # Full (8, lane) vreg tile -> no sublane-masked loads for the bias block.
    b = jnp.zeros((8, lane), jnp.float32)
    b = b.at[0, :hidden_dim].set(p["b1"][0])
    b = b.at[1, :hidden_dim].set(p["b2"][0])
    b = b.at[2, :action_dim].set(p["bp"][0])
    b = b.at[2, action_dim:head].set(p["bv"][0])

    return {"w1": w1.astype(jnp.bfloat16),
            "w2": w2.astype(jnp.bfloat16),
            "wh": wh.astype(jnp.bfloat16),
            "b": b}


def _choose_batch_tiling(B, max_tile=2048):
    """Pick (tile_rows, grid_steps) for the batch axis.

    The kernel is HBM/grid-overhead bound, so use large tiles (up to 2048
    rows). Once the batch is non-trivial, force an even number of >=2 grid
    steps so the "parallel" axis shards across both TensorCores on v7x. Tiles
    are rounded to 16 sublanes (bf16-friendly) and chosen to minimize batch
    padding (e.g. B=520 -> 2 x 264, not 1024)."""
    b16 = _round_up(max(B, 16), 16)
    if b16 <= 256:
        return b16, 1          # tiny batch: one tile; splitting only adds overhead
    steps = max(2, pl.cdiv(b16, max_tile))
    if steps % 2:
        steps += 1             # even step count -> balanced across 2 TCs (v7x)
    tile = _round_up(pl.cdiv(b16, steps), 16)
    return tile, steps


@functools.partial(jax.jit, static_argnums=(2,))
def actor_critic_forward(x, packed, action_dim):
    """x: (B, state_dim) f32. Returns (policy_logits (B, A), state_value (B, 1))."""
    B, state_dim = x.shape
    h_pad = packed["w1"].shape[1]
    head_pad = packed["wh"].shape[1]
    lane = packed["b"].shape[1]

    tb, steps = _choose_batch_tiling(B)
    b_pad = tb * steps

    # bf16 cast + batch-only pad (single fused producer op; state dim untouched).
    xp = x.astype(jnp.bfloat16)
    if b_pad != B:
        xp = jnp.pad(xp, ((0, b_pad - B), (0, 0)))

    out = pl.pallas_call(
        actor_critic_kernel,
        out_shape=jax.ShapeDtypeStruct((b_pad, head_pad), jnp.bfloat16),
        grid=(steps,),
        in_specs=[
            pl.BlockSpec((tb, state_dim), lambda i: (i, 0)),
            pl.BlockSpec((state_dim, h_pad), lambda i: (0, 0)),
            pl.BlockSpec((h_pad, h_pad), lambda i: (0, 0)),
            pl.BlockSpec((h_pad, head_pad), lambda i: (0, 0)),
            pl.BlockSpec((8, lane), lambda i: (0, 0)),
        ],
        out_specs=pl.BlockSpec((tb, head_pad), lambda i: (i, 0)),
        compiler_params=pltpu.CompilerParams(
            dimension_semantics=("parallel",),
            vmem_limit_bytes=32 * 1024 * 1024),
    )(xp, packed["w1"], packed["w2"], packed["wh"], packed["b"])

    # TODO(synk): downstream consumers could take the (B, head_pad) bf16 block
    # directly (index lazily) to avoid these two small slice copies.
    policy_logits = out[:B, :action_dim].astype(jnp.float32)
    state_value = out[:B, action_dim:action_dim + 1].astype(jnp.float32)
    return policy_logits, state_value


def reference_forward(x, p):
    """Pure-JAX reference using the same bf16-operand / f32-accumulate math."""
    bf = jnp.bfloat16

    def lin(a, w, b):
        return jnp.dot(a.astype(bf), w.astype(bf),
                       preferred_element_type=jnp.float32) + b

    h1 = jnp.maximum(lin(x, p["w1"], p["b1"]), 0.0)
    h2 = jnp.maximum(lin(h1, p["w2"], p["b2"]), 0.0)
    return lin(h2, p["wp"], p["bp"]), lin(h2, p["wv"], p["bv"])


if __name__ == "__main__":
    # Small shapes consistent with the module (hidden_dim uses the module default 128).
    B, state_dim, action_dim, hidden_dim = 2, 16, 4, 128

    key = jax.random.PRNGKey(0)
    k_x, k_p = jax.random.split(key)
    x = jax.random.normal(k_x, (B, state_dim), jnp.float32)
    params = init_params(k_p, state_dim, action_dim, hidden_dim)
    packed = pack_params(params, state_dim, action_dim, hidden_dim)

    # Tolerances reflect bf16 operands + bf16 output store (f32 accumulate inside).
    policy_logits, state_value = jax.block_until_ready(
        actor_critic_forward(x, packed, action_dim))
    ref_policy, ref_value = reference_forward(x, params)
    assert policy_logits.shape == (B, action_dim)
    assert state_value.shape == (B, 1)
    assert jnp.allclose(policy_logits, ref_policy, atol=2e-2, rtol=2e-2)
    assert jnp.allclose(state_value, ref_value, atol=2e-2, rtol=2e-2)

    # Exercise the multi-tile path (2 parallel grid steps, batch padded 600 -> 608).
    B2 = 600
    x2 = jax.random.normal(jax.random.PRNGKey(1), (B2, state_dim), jnp.float32)
    pol2, val2 = jax.block_until_ready(actor_critic_forward(x2, packed, action_dim))
    ref_p2, ref_v2 = reference_forward(x2, params)
    assert pol2.shape == (B2, action_dim) and val2.shape == (B2, 1)
    assert jnp.allclose(pol2, ref_p2, atol=2e-2, rtol=2e-2)
    assert jnp.allclose(val2, ref_v2, atol=2e-2, rtol=2e-2)

    print("KERNEL_OK")
</pallas_src>

<mosaic_0001>
module attributes {stable_mosaic.version = 11 : i64} {
  func.func @actor_critic_kernel(%arg0: i32, %arg1: memref<16x16xbf16, #tpu.memory_space<vmem>>, %arg2: memref<16x128xbf16, #tpu.memory_space<vmem>>, %arg3: memref<128x128xbf16, #tpu.memory_space<vmem>>, %arg4: memref<128x128xbf16, #tpu.memory_space<vmem>>, %arg5: memref<8x128xf32, #tpu.memory_space<vmem>>, %arg6: memref<16x128xbf16, #tpu.memory_space<vmem>>) attributes {dimension_semantics = [#tpu.dimension_semantics<parallel>], iteration_bounds = array<i64: 1>, scalar_prefetch = 0 : i64, scratch_operands = 0 : i64, tpu.core_type = #tpu.core_type<tc>, window_params = [{transform_indices = @transform_0, window_bounds = array<i64: 16, 16>}, {pipeline_mode = #tpu.pipeline_mode<synchronous>, transform_indices = @transform_1, window_bounds = array<i64: 16, 128>}, {pipeline_mode = #tpu.pipeline_mode<synchronous>, transform_indices = @transform_2, window_bounds = array<i64: 128, 128>}, {pipeline_mode = #tpu.pipeline_mode<synchronous>, transform_indices = @transform_3, window_bounds = array<i64: 128, 128>}, {pipeline_mode = #tpu.pipeline_mode<synchronous>, transform_indices = @transform_4, window_bounds = array<i64: 8, 128>}, {transform_indices = @transform_5, window_bounds = array<i64: 16, 128>}]} {
    %c0 = arith.constant 0 : index
    %c0_0 = arith.constant 0 : index
    %0 = vector.load %arg1[%c0, %c0_0] : memref<16x16xbf16, #tpu.memory_space<vmem>>, vector<16x16xbf16>
    %c0_1 = arith.constant 0 : index
    %c0_2 = arith.constant 0 : index
    %1 = vector.load %arg2[%c0_1, %c0_2] : memref<16x128xbf16, #tpu.memory_space<vmem>>, vector<16x128xbf16>
    %cst = arith.constant dense<0.000000e+00> : vector<16x128xf32>
    %2 = tpu.matmul %0, %1, %cst {dimension_numbers = #tpu.dot_dimension_numbers<[1], [0], [0], [1], [0, 0, 1, 1], [], []>} : vector<16x16xbf16>, vector<16x128xbf16>, vector<16x128xf32> -> vector<16x128xf32>
    %c0_3 = arith.constant 0 : index
    %c0_4 = arith.constant 0 : index
    %3 = vector.load %arg5[%c0_3, %c0_4] : memref<8x128xf32, #tpu.memory_space<vmem>>, vector<1x128xf32>
    %4 = vector.broadcast %3 : vector<1x128xf32> to vector<16x128xf32>
    %5 = arith.addf %2, %4 : vector<16x128xf32>
    %cst_5 = arith.constant 0.000000e+00 : f32
    %6 = vector.broadcast %cst_5 : f32 to vector<16x128xf32>
    %7 = arith.maximumf %5, %6 : vector<16x128xf32>
    %8 = arith.truncf %7 : vector<16x128xf32> to vector<16x128xbf16>
    %c0_6 = arith.constant 0 : index
    %c0_7 = arith.constant 0 : index
    %9 = vector.load %arg3[%c0_6, %c0_7] : memref<128x128xbf16, #tpu.memory_space<vmem>>, vector<128x128xbf16>
    %cst_8 = arith.constant dense<0.000000e+00> : vector<16x128xf32>
    %10 = tpu.matmul %8, %9, %cst_8 {dimension_numbers = #tpu.dot_dimension_numbers<[1], [0], [0], [1], [0, 0, 1, 1], [], []>} : vector<16x128xbf16>, vector<128x128xbf16>, vector<16x128xf32> -> vector<16x128xf32>
    %c1 = arith.constant 1 : index
    %c0_9 = arith.constant 0 : index
    %11 = vector.load %arg5[%c1, %c0_9] : memref<8x128xf32, #tpu.memory_space<vmem>>, vector<1x128xf32>
    %12 = vector.broadcast %11 : vector<1x128xf32> to vector<16x128xf32>
    %13 = arith.addf %10, %12 : vector<16x128xf32>
    %cst_10 = arith.constant 0.000000e+00 : f32
    %14 = vector.broadcast %cst_10 : f32 to vector<16x128xf32>
    %15 = arith.maximumf %13, %14 : vector<16x128xf32>
    %16 = arith.truncf %15 : vector<16x128xf32> to vector<16x128xbf16>
    %c0_11 = arith.constant 0 : index
    %c0_12 = arith.constant 0 : index
    %17 = vector.load %arg4[%c0_11, %c0_12] : memref<128x128xbf16, #tpu.memory_space<vmem>>, vector<128x128xbf16>
    %cst_13 = arith.constant dense<0.000000e+00> : vector<16x128xf32>
    %18 = tpu.matmul %16, %17, %cst_13 {dimension_numbers = #tpu.dot_dimension_numbers<[1], [0], [0], [1], [0, 0, 1, 1], [], []>} : vector<16x128xbf16>, vector<128x128xbf16>, vector<16x128xf32> -> vector<16x128xf32>
    %c2 = arith.constant 2 : index
    %c0_14 = arith.constant 0 : index
    %19 = vector.load %arg5[%c2, %c0_14] : memref<8x128xf32, #tpu.memory_space<vmem>>, vector<1x128xf32>
    %20 = vector.broadcast %19 : vector<1x128xf32> to vector<16x128xf32>
    %21 = arith.addf %18, %20 : vector<16x128xf32>
    %22 = arith.truncf %21 : vector<16x128xf32> to vector<16x128xbf16>
    %c0_15 = arith.constant 0 : index
    %c0_16 = arith.constant 0 : index
    %23 = vector.load %arg6[%c0_15, %c0_16] : memref<16x128xbf16, #tpu.memory_space<vmem>>, vector<16x128xbf16>
    tpu.vector_store %arg6[%c0_15, %c0_16], %22 {strides = array<i32>} : memref<16x128xbf16, #tpu.memory_space<vmem>>, vector<16x128xbf16>,
    return
  }
  func.func @transform_0(%arg0: i32) -> (i32, i32) {
    %c0_i32 = arith.constant 0 : i32
    %c0_i32_0 = arith.constant 0 : i32
    return %arg0, %c0_i32 : i32, i32
  }
  func.func @transform_1(%arg0: i32) -> (i32, i32) {
    %c0_i32 = arith.constant 0 : i32
    %c0_i32_0 = arith.constant 0 : i32
    %c0_i32_1 = arith.constant 0 : i32
    return %c0_i32, %c0_i32_0 : i32, i32
  }
  func.func @transform_2(%arg0: i32) -> (i32, i32) {
    %c0_i32 = arith.constant 0 : i32
    %c0_i32_0 = arith.constant 0 : i32
    %c0_i32_1 = arith.constant 0 : i32
    return %c0_i32, %c0_i32_0 : i32, i32
  }
  func.func @transform_3(%arg0: i32) -> (i32, i32) {
    %c0_i32 = arith.constant 0 : i32
    %c0_i32_0 = arith.constant 0 : i32
    %c0_i32_1 = arith.constant 0 : i32
    return %c0_i32, %c0_i32_0 : i32, i32
  }
  func.func @transform_4(%arg0: i32) -> (i32, i32) {
    %c0_i32 = arith.constant 0 : i32
    %c0_i32_0 = arith.constant 0 : i32
    %c0_i32_1 = arith.constant 0 : i32
    return %c0_i32, %c0_i32_0 : i32, i32
  }
  func.func @transform_5(%arg0: i32) -> (i32, i32) {
    %c0_i32 = arith.constant 0 : i32
    %c0_i32_0 = arith.constant 0 : i32
    return %arg0, %c0_i32 : i32, i32
  }
}

</mosaic_0001>

<llo_original>
// kernel: actor_critic_forward.1
$region0: #{actor_critic_forward.1}
  #allocation0 [shape = 'u32[]', space=smem, size = 0x4, offset = 0x4, fixed_abs, tag = 'smem constant byte address 0x4 - core index']
  #allocation1 [shape = 'u32[144,128]{1,0:T(1,128)}', space=vmem, size = 0x12000, scoped, tag = 'internal scratch']
  %s0 = inlined_call_operand.vmem [shape: bf16[16,16], index: 0, kind: input, shape index: {}]
  %s1 = inlined_call_operand.vmem [shape: bf16[16,128], index: 1, kind: input, shape index: {}]
  %s2 = inlined_call_operand.hbm [shape: bf16[128,128], index: 2, kind: input, shape index: {}]
  %s3 = inlined_call_operand.hbm [shape: bf16[128,128], index: 3, kind: input, shape index: {}]
  %s4 = inlined_call_operand.vmem [shape: f32[8,128], index: 4, kind: input, shape index: {}]
  %s5 = inlined_call_operand.vmem [shape: bf16[16,128], index: 5, kind: output, shape index: {}]
  %s6 = sld [smem:[#allocation0]]
  $region38: #{actor_critic_forward.1} parent=0
    _
  %s8 = ssub.s32 1, %s6
  %s9 = scalar_select 0, %s8, %s6
  $region1: #{actor_critic_forward.1} parent=0
    #allocation2 [shape = 'u8[32768]{0}', space=vmem, size = 0x8000, scoped, tag = 'input window, operand 2, single buffered']
    #allocation3 [shape = 's32[1]{0}', space=sflag, size = 0x4, scoped, tag = 'scoped memory for actor_critic_forward.1']
    #allocation4 [shape = 'u8[32768]{0}', space=vmem, size = 0x8000, scoped, tag = 'input window, operand 3, single buffered']
    #allocation5 [shape = 's32[1]{0}', space=sflag, size = 0x4, scoped, tag = 'scoped memory for actor_critic_forward.1']
    %10 = vsyncpa [#allocation3], 0
    %11 = vsyncpa [#allocation5], 0
    // Predicated region
    $region2: #{actor_critic_forward.1} parent=1 // pred_check
      _
    $region3: #{actor_critic_forward.1} parent=1 // pred_check_branch
      %13 = sbr.rel (0) target = $region5
    $region4: #{actor_critic_forward.1} parent=1 // pred_region
      _
    $region5: #{actor_critic_forward.1} parent=1 // pred_fallthru
      _
    // Predicated region
    $region6: #{actor_critic_forward.1} parent=1 // pred_check
      _
    $region7: #{actor_critic_forward.1} parent=1 // pred_check_branch
      %15 = sbr.rel (0) target = $region9
    $region8: #{actor_critic_forward.1} parent=1 // pred_region
      _
    $region9: #{actor_critic_forward.1} parent=1 // pred_fallthru
      _
    // Predicated region
    $region10: #{actor_critic_forward.1} parent=1 // pred_check
      _
    $region11: #{actor_critic_forward.1} parent=1 // pred_check_branch
      %17 = sbr.rel (0) target = $region13
    $region12: #{actor_critic_forward.1} parent=1 // pred_region
      %s19 = ssub.s32 1024, 1024
      %20 = vsyncadd [#allocation3], %s19
      %s21 = sshll.u32 [#allocation2], 4
      %s22 = int_to_ptr.vmem [resolvable:$true] %s21
      %27 = dma.hbm_to_vmem [thread:$0]  %s2, 1024, %s22, [#allocation3], 64, 64, 4
    $region13: #{actor_critic_forward.1} parent=1 // pred_fallthru
      _
    // Predicated region
    $region14: #{actor_critic_forward.1} parent=1 // pred_check
      _
    $region15: #{actor_critic_forward.1} parent=1 // pred_check_branch
      %29 = sbr.rel (0) target = $region17
    $region16: #{actor_critic_forward.1} parent=1 // pred_region
      %s31 = ssub.s32 1024, 1024
      %32 = vsyncadd [#allocation5], %s31
      %s33 = sshll.u32 [#allocation4], 4
      %s34 = int_to_ptr.vmem [resolvable:$true] %s33
      %39 = dma.hbm_to_vmem [thread:$0]  %s3, 1024, %s34, [#allocation5], 64, 64, 4
    $region17: #{actor_critic_forward.1} parent=1 // pred_fallthru
      _
    // Predicated region
    $region18: #{actor_critic_forward.1} parent=1 // pred_check
      _
    $region19: #{actor_critic_forward.1} parent=1 // pred_check_branch
      %41 = sbr.rel (0) target = $region21
    $region20: #{actor_critic_forward.1} parent=1 // pred_region
      _
    $region21: #{actor_critic_forward.1} parent=1 // pred_fallthru
      _
    // Predicated region
    $region22: #{actor_critic_forward.1} parent=1 // pred_check
      _
    $region23: #{actor_critic_forward.1} parent=1 // pred_check_branch
      %43 = sbr.rel (0) target = $region25
    $region24: #{actor_critic_forward.1} parent=1 // pred_region
      %44 = dma.done [#allocation3], 1024
    $region25: #{actor_critic_forward.1} parent=1 // pred_fallthru
      _
    // Predicated region
    $region26: #{actor_critic_forward.1} parent=1 // pred_check
      _
    $region27: #{actor_critic_forward.1} parent=1 // pred_check_branch
      %46 = sbr.rel (0) target = $region29
    $region28: #{actor_critic_forward.1} parent=1 // pred_region
      %47 = dma.done [#allocation5], 1024
    $region29: #{actor_critic_forward.1} parent=1 // pred_fallthru
      _
    %v49 = vld [vmem:[%s0] sm:$0xf]
    %v50 = vld [vmem:[%s0 + $0x4] sm:$0xf]
    %v51 = vld [vmem:[%s1] sm:$0xf]
    %v52 = vld [vmem:[%s1 + $0x4] sm:$0xf]
    %v53 = vld [vmem:[%s4] sm:$0x1]
    %v54 = vlaneseq
    %v55 = vshrl.u32 %v54, 7
    %v56 = vsub.s32 0, %v55
    %v57 = vrot.slane %v53, %v56
    %v60 = vunpack.c.l.b16 %v49
    %v61 = vunpack.c.l.b16 %v50
    %v62 = vpack.c.b16 %v61, %v60
    %v65 = vunpack.c.l.b16 %v51
    %v66 = vunpack.c.l.b16 %v52
    %v67 = vpack.c.b16 %v66, %v65
    %vm69 = vcmask 130048
    %v71 = vsel %vm69, %v62, 0
    %73 = vmatprep.subr.bf16.mxu0 0
    %74 = vmatpush1.bf16.msra.mxu0 %v67
    %75 = vmatprep.subr.bf16.mxu0 0
    %76 = vmatpush1.bf16.msra.mxu0 0
    %77 = vmatprep.subr.bf16.mxu0 0
    %78 = vmatpush1.bf16.msra.mxu0 0
    %79 = vmatprep.subr.bf16.mxu0 0
    %80 = vmatpush1.bf16.msra.mxu0 0
    %81 = vmatprep.subr.bf16.mxu0 0
    %82 = vmatpush1.bf16.msra.mxu0 0
    %83 = vmatprep.subr.bf16.mxu0 0
    %84 = vmatpush1.bf16.msra.mxu0 0
    %85 = vmatprep.subr.bf16.mxu0 0
    %86 = vmatpush1.bf16.msra.mxu0 0
    %87 = vmatprep.subr.bf16.mxu0 0
    %88 = vmatpush1.bf16.msra.mxu0 0
    %89 = vmatprep.subr.bf16.mxu0 0
    %90 = vmatpush1.bf16.msra.mxu0 0
    %91 = vmatprep.subr.bf16.mxu0 0
    %92 = vmatpush1.bf16.msra.mxu0 0
    %93 = vmatprep.subr.bf16.mxu0 0
    %94 = vmatpush1.bf16.msra.mxu0 0
    %95 = vmatprep.subr.bf16.mxu0 0
    %96 = vmatpush1.bf16.msra.mxu0 0
    %97 = vmatprep.subr.bf16.mxu0 0
    %98 = vmatpush1.bf16.msra.mxu0 0
    %99 = vmatprep.subr.bf16.mxu0 0
    %100 = vmatpush1.bf16.msra.mxu0 0
    %101 = vmatprep.subr.bf16.mxu0 0
    %102 = vmatpush1.bf16.msra.mxu0 0
    %103 = vmatprep.subr.bf16.mxu0 0
    %104 = vmatpush1.bf16.msra.mxu0 0
    %105 = vmatprep.mubr.bf16.mxu0 0
    %106 = vmatmul.mubr.bf16.gmra.mrb[0].mxu0 %v71
    %v107 = vpop.f32.mrb[0].mxu0
    %v108 = vadd.f32 %v57, %v107
    %v109 = vpop.f32.mrb[0].mxu0
    %v110 = vpop.f32.mrb[0].mxu0
    %v111 = vadd.f32 %v57, %v110
    %v112 = vpop.f32.mrb[0].mxu0
    %113 = vdwg.mxu0
    %v114 = vmax.f32 %v108, 0.0
    %v115 = vmax.f32 %v111, 0.0
    %v116 = vpack.c.bf16 %v115, %v114
    %v117 = vld [vmem:[#allocation2] sm:$0xf]
    %v118 = vld [vmem:[#allocation2 + $0x4] sm:$0xf]
    %v119 = vld [vmem:[#allocation2 + $0x8] sm:$0xf]
    %v120 = vld [vmem:[#allocation2 + $0xc] sm:$0xf]
    %v121 = vld [vmem:[#allocation2 + $0x10] sm:$0xf]
    %v122 = vld [vmem:[#allocation2 + $0x14] sm:$0xf]
    %v123 = vld [vmem:[#allocation2 + $0x18] sm:$0xf]
    %v124 = vld [vmem:[#allocation2 + $0x1c] sm:$0xf]
    %v125 = vld [vmem:[#allocation2 + $0x20] sm:$0xf]
    %v126 = vld [vmem:[#allocation2 + $0x24] sm:$0xf]
    %v127 = vld [vmem:[#allocation2 + $0x28] sm:$0xf]
    %v128 = vld [vmem:[#allocation2 + $0x2c] sm:$0xf]
    %v129 = vld [vmem:[#allocation2 + $0x30] sm:$0xf]
    %v130 = vld [vmem:[#allocation2 + $0x34] sm:$0xf]
    %v131 = vld [vmem:[#allocation2 + $0x38] sm:$0xf]
    %v132 = vld [vmem:[#allocation2 + $0x3c] sm:$0xf]
    %v133 = vld [vmem:[%s4 + $0x1] sm:$0x1]
    %v134 = vlaneseq
    %v135 = vshrl.u32 %v134, 7
    %v136 = vsub.s32 0, %v135
    %v137 = vrot.slane %v133, %v136
    %v154 = vunpack.c.l.b16 %v117
    %v155 = vunpack.c.l.b16 %v118
    %v156 = vunpack.c.l.b16 %v119
    %v157 = vunpack.c.l.b16 %v120
    %v158 = vunpack.c.l.b16 %v121
    %v159 = vunpack.c.l.b16 %v122
    %v160 = vunpack.c.l.b16 %v123
    %v161 = vunpack.c.l.b16 %v124
    %v162 = vunpack.c.l.b16 %v125
    %v163 = vunpack.c.l.b16 %v126
    %v164 = vunpack.c.l.b16 %v127
    %v165 = vunpack.c.l.b16 %v128
    %v166 = vunpack.c.l.b16 %v129
    %v167 = vunpack.c.l.b16 %v130
    %v168 = vunpack.c.l.b16 %v131
    %v169 = vunpack.c.l.b16 %v132
    %v170 = vpack.c.b16 %v155, %v154
    %v171 = vpack.c.b16 %v157, %v156
    %v172 = vpack.c.b16 %v159, %v158
    %v173 = vpack.c.b16 %v161, %v160
    %v174 = vpack.c.b16 %v163, %v162
    %v175 = vpack.c.b16 %v165, %v164
    %v176 = vpack.c.b16 %v167, %v166
    %v177 = vpack.c.b16 %v169, %v168
    %186 = vmatprep.subr.bf16.mxu0 0
    %187 = vmatpush1.bf16.msra.mxu0 %v170
    %188 = vmatprep.subr.bf16.mxu0 0
    %189 = vmatpush1.bf16.msra.mxu0 %v171
    %190 = vmatprep.subr.bf16.mxu0 0
    %191 = vmatpush1.bf16.msra.mxu0 %v172
    %192 = vmatprep.subr.bf16.mxu0 0
    %193 = vmatpush1.bf16.msra.mxu0 %v173
    %194 = vmatprep.subr.bf16.mxu0 0
    %195 = vmatpush1.bf16.msra.mxu0 %v174
    %196 = vmatprep.subr.bf16.mxu0 0
    %197 = vmatpush1.bf16.msra.mxu0 %v175
    %198 = vmatprep.subr.bf16.mxu0 0
    %199 = vmatpush1.bf16.msra.mxu0 %v176
    %200 = vmatprep.subr.bf16.mxu0 0
    %201 = vmatpush1.bf16.msra.mxu0 %v177
    %202 = vmatprep.subr.bf16.mxu0 0
    %203 = vmatpush1.bf16.msra.mxu0 0
    %204 = vmatprep.subr.bf16.mxu0 0
    %205 = vmatpush1.bf16.msra.mxu0 0
    %206 = vmatprep.subr.bf16.mxu0 0
    %207 = vmatpush1.bf16.msra.mxu0 0
    %208 = vmatprep.subr.bf16.mxu0 0
    %209 = vmatpush1.bf16.msra.mxu0 0
    %210 = vmatprep.subr.bf16.mxu0 0
    %211 = vmatpush1.bf16.msra.mxu0 0
    %212 = vmatprep.subr.bf16.mxu0 0
    %213 = vmatpush1.bf16.msra.mxu0 0
    %214 = vmatprep.subr.bf16.mxu0 0
    %215 = vmatpush1.bf16.msra.mxu0 0
    %216 = vmatprep.subr.bf16.mxu0 0
    %217 = vmatpush1.bf16.msra.mxu0 0
    %218 = vmatprep.mubr.bf16.mxu0 0
    %219 = vmatmul.mubr.bf16.gmra.mrb[0].mxu0 %v116
    %v220 = vpop.f32.mrb[0].mxu0
    %v221 = vadd.f32 %v137, %v220
    %v222 = vpop.f32.mrb[0].mxu0
    %v223 = vpop.f32.mrb[0].mxu0
    %v224 = vadd.f32 %v137, %v223
    %v225 = vpop.f32.mrb[0].mxu0
    %226 = vdwg.mxu0
    %v227 = vmax.f32 %v221, 0.0
    %v228 = vmax.f32 %v224, 0.0
    %v229 = vpack.c.bf16 %v228, %v227
    %v230 = vld [vmem:[#allocation4] sm:$0xf]
    %v231 = vld [vmem:[#allocation4 + $0x4] sm:$0xf]
    %v232 = vld [vmem:[#allocation4 + $0x8] sm:$0xf]
    %v233 = vld [vmem:[#allocation4 + $0xc] sm:$0xf]
    %v234 = vld [vmem:[#allocation4 + $0x10] sm:$0xf]
    %v235 = vld [vmem:[#allocation4 + $0x14] sm:$0xf]
    %v236 = vld [vmem:[#allocation4 + $0x18] sm:$0xf]
    %v237 = vld [vmem:[#allocation4 + $0x1c] sm:$0xf]
    %v238 = vld [vmem:[#allocation4 + $0x20] sm:$0xf]
    %v239 = vld [vmem:[#allocation4 + $0x24] sm:$0xf]
    %v240 = vld [vmem:[#allocation4 + $0x28] sm:$0xf]
    %v241 = vld [vmem:[#allocation4 + $0x2c] sm:$0xf]
    %v242 = vld [vmem:[#allocation4 + $0x30] sm:$0xf]
    %v243 = vld [vmem:[#allocation4 + $0x34] sm:$0xf]
    %v244 = vld [vmem:[#allocation4 + $0x38] sm:$0xf]
    %v245 = vld [vmem:[#allocation4 + $0x3c] sm:$0xf]
    %v246 = vld [vmem:[%s4 + $0x2] sm:$0x1]
    %v247 = vlaneseq
    %v248 = vshrl.u32 %v247, 7
    %v249 = vsub.s32 0, %v248
    %v250 = vrot.slane %v246, %v249
    %v267 = vunpack.c.l.b16 %v230
    %v268 = vunpack.c.l.b16 %v231
    %v269 = vunpack.c.l.b16 %v232
    %v270 = vunpack.c.l.b16 %v233
    %v271 = vunpack.c.l.b16 %v234
    %v272 = vunpack.c.l.b16 %v235
    %v273 = vunpack.c.l.b16 %v236
    %v274 = vunpack.c.l.b16 %v237
    %v275 = vunpack.c.l.b16 %v238
    %v276 = vunpack.c.l.b16 %v239
    %v277 = vunpack.c.l.b16 %v240
    %v278 = vunpack.c.l.b16 %v241
    %v279 = vunpack.c.l.b16 %v242
    %v280 = vunpack.c.l.b16 %v243
    %v281 = vunpack.c.l.b16 %v244
    %v282 = vunpack.c.l.b16 %v245
    %v283 = vpack.c.b16 %v268, %v267
    %v284 = vpack.c.b16 %v270, %v269
    %v285 = vpack.c.b16 %v272, %v271
    %v286 = vpack.c.b16 %v274, %v273
    %v287 = vpack.c.b16 %v276, %v275
    %v288 = vpack.c.b16 %v278, %v277
    %v289 = vpack.c.b16 %v280, %v279
    %v290 = vpack.c.b16 %v282, %v281
    %299 = vmatprep.subr.bf16.mxu0 0
    %300 = vmatpush1.bf16.msra.mxu0 %v283
    %301 = vmatprep.subr.bf16.mxu0 0
    %302 = vmatpush1.bf16.msra.mxu0 %v284
    %303 = vmatprep.subr.bf16.mxu0 0
    %304 = vmatpush1.bf16.msra.mxu0 %v285
    %305 = vmatprep.subr.bf16.mxu0 0
    %306 = vmatpush1.bf16.msra.mxu0 %v286
    %307 = vmatprep.subr.bf16.mxu0 0
    %308 = vmatpush1.bf16.msra.mxu0 %v287
    %309 = vmatprep.subr.bf16.mxu0 0
    %310 = vmatpush1.bf16.msra.mxu0 %v288
    %311 = vmatprep.subr.bf16.mxu0 0
    %312 = vmatpush1.bf16.msra.mxu0 %v289
    %313 = vmatprep.subr.bf16.mxu0 0
    %314 = vmatpush1.bf16.msra.mxu0 %v290
    %315 = vmatprep.subr.bf16.mxu0 0
    %316 = vmatpush1.bf16.msra.mxu0 0
    %317 = vmatprep.subr.bf16.mxu0 0
    %318 = vmatpush1.bf16.msra.mxu0 0
    %319 = vmatprep.subr.bf16.mxu0 0
    %320 = vmatpush1.bf16.msra.mxu0 0
    %321 = vmatprep.subr.bf16.mxu0 0
    %322 = vmatpush1.bf16.msra.mxu0 0
    %323 = vmatprep.subr.bf16.mxu0 0
    %324 = vmatpush1.bf16.msra.mxu0 0
    %325 = vmatprep.subr.bf16.mxu0 0
    %326 = vmatpush1.bf16.msra.mxu0 0
    %327 = vmatprep.subr.bf16.mxu0 0
    %328 = vmatpush1.bf16.msra.mxu0 0
    %329 = vmatprep.subr.bf16.mxu0 0
    %330 = vmatpush1.bf16.msra.mxu0 0
    %331 = vmatprep.mubr.bf16.mxu0 0
    %332 = vmatmul.mubr.bf16.gmra.mrb[0].mxu0 %v229
    %v333 = vpop.f32.mrb[0].mxu0
    %v334 = vadd.f32 %v250, %v333
    %v335 = vpop.f32.mrb[0].mxu0
    %v336 = vpop.f32.mrb[0].mxu0
    %v337 = vadd.f32 %v250, %v336
    %v338 = vpop.f32.mrb[0].mxu0
    %339 = vdwg.mxu0
    %v340 = vpack.c.bf16 %v337, %v334
    %v342 = vunpack.c.l.b16 %v340
    %v343 = vunpack.c.h.b16 %v340
    %v344 = vpack.c.b16 %v342, %v342
    %v345 = vpack.c.b16 %v343, %v343
    %348 = vst [vmem:[%s5] sm:$0xf] %v344
    %349 = vst [vmem:[%s5 + $0x4] sm:$0xf] %v345
    // Predicated region
    $region30: #{actor_critic_forward.1} parent=1 // pred_check
      _
    $region31: #{actor_critic_forward.1} parent=1 // pred_check_branch
      %351 = sbr.rel (0) target = $region33
    $region32: #{actor_critic_forward.1} parent=1 // pred_region
      _
    $region33: #{actor_critic_forward.1} parent=1 // pred_fallthru
      _
    // Predicated region
    $region34: #{actor_critic_forward.1} parent=1 // pred_check
      _
    $region35: #{actor_critic_forward.1} parent=1 // pred_check_branch
      %353 = sbr.rel (0) target = $region37
    $region36: #{actor_critic_forward.1} parent=1 // pred_region
      _
    $region37: #{actor_critic_forward.1} parent=1 // pred_fallthru
      _
    %354 = vsyncpa [#allocation3], 1
    %355 = vsyncpa [#allocation5], 1

</llo_original>
